<compile_context>
chip_gen: v6e
topology: v6e:2x2x1
jax: 0.10.0
libtpu: 0.0.40
codegen_flags: <defaults>
</compile_context>

<pallas_src>
import functools
import math

import jax
import jax.numpy as jnp
from jax.experimental import pallas as pl
from jax.experimental.pallas import tpu as pltpu

# -log(off-label clamp value). log(1.0) == 0 on the label column, so the RCE
# term reduces exactly to  -log(1e-4) * sum_{j != label} clamp(p_j, 1e-7, 1).
_NEG_LOG_LABEL_EPS = -math.log(1e-4)


def _sce_tile_kernel(pred_ref, labels_ref, out_ref, *, alpha, beta, n_rows, needs_mask):
    pred = pred_ref[...].astype(jnp.float32)      # (Tn, C)  upcast in-register
    labels = labels_ref[...]                      # (Tn, 1)  int32
    tn, c = pred.shape

    if needs_mask:
        # Ragged last block: rows beyond n_rows are OOB-padded garbage.
        row_ids = jax.lax.broadcasted_iota(jnp.int32, (tn, 1), 0)
        global_row = pl.program_id(0) * tn + row_ids
        valid_b = global_row < n_rows                             # (Tn, 1) bool
        pred = jnp.where(valid_b, pred, 0.0)                      # NaN/Inf-safe

    # one-hot via 2-D iota compare (VPU).
    class_ids = jax.lax.broadcasted_iota(jnp.int32, (tn, c), 1)
    one_hot = (class_ids == labels).astype(jnp.float32)           # (Tn, C)

    # numerically stable softmax / log-softmax
    row_max = jnp.max(pred, axis=-1, keepdims=True)
    shifted = pred - row_max
    exps = jnp.exp(shifted)                                       # only N*C transcendental
    sumexp = jnp.sum(exps, axis=-1, keepdims=True)
    log_softmax = shifted - jnp.log(sumexp)                       # (Tn,1) log
    softmax = exps * pl.reciprocal(sumexp)                        # (Tn,1) recip + bcast mul

    # clamp(softmax, 1e-7, 1.0): upper clamp is a no-op (softmax <= 1).
    p = jnp.maximum(softmax, 1e-7)

    # Fused CE + RCE per-element term, single full-tile reduction.
    #   CE  element:  -one_hot * log_softmax
    #   RCE element:  -log(1e-4) * p * (1 - one_hot)        (exact rewrite)
    fused = (jnp.float32(alpha) * (-(one_hot * log_softmax))
             + jnp.float32(beta * _NEG_LOG_LABEL_EPS) * (p - one_hot * p))
    if needs_mask:
        fused = jnp.where(valid_b, fused, 0.0)
    out_ref[0, 0] = jnp.sum(fused)


def sce_loss(pred, labels, *, alpha, beta, num_classes,
             tile_n=None, vmem_budget_bytes=8 << 20):
    """pred: (N, C) float, labels: (N,) int. Returns scalar float32 loss."""
    n, c = pred.shape
    assert c == num_classes
    labels2d = labels.astype(jnp.int32).reshape(n, 1)

    itemsize = jnp.dtype(pred.dtype).itemsize
    if tile_n is None:
        # double-buffered pred tile (2 * tile_n * C * itemsize) must fit the budget;
        # budget is sized so defaults are safe even on v7x's 64 MiB VMEM.
        max_tile = max(8, min(1024, ((vmem_budget_bytes // (2 * c * itemsize)) // 8) * 8))
        tile_n = n if n <= max_tile else max_tile

    num_tiles = int(pl.cdiv(n, tile_n))
    needs_mask = (n % tile_n) != 0

    kernel = functools.partial(
        _sce_tile_kernel,
        alpha=float(alpha),
        beta=float(beta),
        n_rows=n,
        needs_mask=needs_mask,
    )

    cost = pl.CostEstimate(
        flops=10 * n * c,
        transcendentals=n * c,
        bytes_accessed=n * c * itemsize + n * 4 + num_tiles * 4,
    )

    partials = pl.pallas_call(
        kernel,
        out_shape=jax.ShapeDtypeStruct((num_tiles, 1), jnp.float32),
        grid_spec=pltpu.PrefetchScalarGridSpec(
            num_scalar_prefetch=0,
            grid=(num_tiles,),
            in_specs=[
                pl.BlockSpec((tile_n, c), lambda i: (i, 0)),   # pred tile
                pl.BlockSpec((tile_n, 1), lambda i: (i, 0)),   # labels tile
            ],
            out_specs=pl.BlockSpec((1, 1), lambda i: (i, 0),
                                   memory_space=pltpu.MemorySpace.SMEM),
        ),
        compiler_params=pltpu.CompilerParams(
            dimension_semantics=("parallel",),     # no cross-tile carry -> megacore-friendly
            vmem_limit_bytes=32 * 1024 * 1024,
        ),
        cost_estimate=cost,
    )(pred, labels2d)

    # Tiny final combine: both CE and RCE are means over the batch size.
    return jnp.sum(partials) / jnp.float32(n)


def sce_loss_ref(pred, labels, *, alpha, beta, num_classes):
    """Pure-JAX reference mirroring the PyTorch module."""
    pred = pred.astype(jnp.float32)
    logp = jax.nn.log_softmax(pred, axis=-1)
    ce = jnp.mean(-jnp.take_along_axis(logp, labels[:, None], axis=-1)[:, 0])
    p = jnp.clip(jax.nn.softmax(pred, axis=-1), 1e-7, 1.0)
    one_hot = jax.nn.one_hot(labels, num_classes, dtype=jnp.float32)
    one_hot = jnp.clip(one_hot, 1e-4, 1.0)
    rce = -jnp.sum(p * jnp.log(one_hot), axis=-1)
    return alpha * ce + beta * jnp.mean(rce)


if __name__ == "__main__":
    # ESC-50 has 50 classes; use a small batch.
    num_class = 50
    alpha, beta = 0.1, 1.0
    key = jax.random.PRNGKey(0)

    # --- primary check: batch divides the tile (fast path, no masking ops) ---
    batch = 8
    kp, kl, key = jax.random.split(key, 3)
    pred = jax.random.normal(kp, (batch, num_class), dtype=jnp.float32)
    labels = jax.random.randint(kl, (batch,), 0, num_class, dtype=jnp.int32)

    loss = jax.jit(
        functools.partial(sce_loss, alpha=alpha, beta=beta, num_classes=num_class)
    )(pred, labels)
    jax.block_until_ready(loss)
    ref = sce_loss_ref(pred, labels, alpha=alpha, beta=beta, num_classes=num_class)
    assert jnp.allclose(loss, ref, rtol=1e-5, atol=1e-5), (loss, ref)

    # --- secondary check: ragged last tile exercises the in-kernel mask path ---
    batch2 = 13
    kp2, kl2, key = jax.random.split(key, 3)
    pred2 = jax.random.normal(kp2, (batch2, num_class), dtype=jnp.float32)
    labels2 = jax.random.randint(kl2, (batch2,), 0, num_class, dtype=jnp.int32)

    loss2 = jax.jit(
        functools.partial(sce_loss, alpha=alpha, beta=beta,
                          num_classes=num_class, tile_n=8)
    )(pred2, labels2)
    jax.block_until_ready(loss2)
    ref2 = sce_loss_ref(pred2, labels2, alpha=alpha, beta=beta, num_classes=num_class)
    assert jnp.allclose(loss2, ref2, rtol=1e-5, atol=1e-5), (loss2, ref2)

    print("KERNEL_OK")
</pallas_src>

<mosaic_0001>
module attributes {stable_mosaic.version = 11 : i64} {
  func.func @_sce_tile_kernel(%arg0: i32, %arg1: memref<8x50xf32, #tpu.memory_space<vmem>>, %arg2: memref<8x1xi32, #tpu.memory_space<vmem>>, %arg3: memref<1x1xf32, #tpu.memory_space<smem>>) attributes {dimension_semantics = [#tpu.dimension_semantics<parallel>], iteration_bounds = array<i64: 1>, scalar_prefetch = 0 : i64, scratch_operands = 0 : i64, tpu.core_type = #tpu.core_type<tc>, window_params = [{transform_indices = @transform_0, window_bounds = array<i64: 8, 50>}, {transform_indices = @transform_1, window_bounds = array<i64: 8, 1>}, {transform_indices = @transform_2, window_bounds = array<i64: 1, 1>}]} {
    %c0 = arith.constant 0 : index
    %c0_0 = arith.constant 0 : index
    %0 = vector.load %arg1[%c0, %c0_0] : memref<8x50xf32, #tpu.memory_space<vmem>>, vector<8x50xf32>
    %c0_1 = arith.constant 0 : index
    %c0_2 = arith.constant 0 : index
    %1 = vector.load %arg2[%c0_1, %c0_2] : memref<8x1xi32, #tpu.memory_space<vmem>>, vector<8x1xi32>
    %2 = tpu.iota {dimensions = array<i32: 1>} : vector<8x50xi32>
    %3 = vector.broadcast %1 : vector<8x1xi32> to vector<8x50xi32>
    %4 = arith.cmpi eq, %2, %3 : vector<8x50xi32>
    %5 = arith.extui %4 : vector<8x50xi1> to vector<8x50xi32>
    %6 = arith.sitofp %5 : vector<8x50xi32> to vector<8x50xf32>
    %cst = arith.constant dense<0xFF800000> : vector<8xf32>
    %7 = vector.multi_reduction <maximumf>, %0, %cst [1] : vector<8x50xf32> to vector<8xf32>
    %8 = vector.shape_cast %7 : vector<8xf32> to vector<8x1xf32>
    %9 = vector.broadcast %8 : vector<8x1xf32> to vector<8x50xf32>
    %10 = arith.subf %0, %9 : vector<8x50xf32>
    %11 = math.exp %10 : vector<8x50xf32>
    %cst_3 = arith.constant dense<0.000000e+00> : vector<8xf32>
    %12 = vector.multi_reduction <add>, %11, %cst_3 [1] : vector<8x50xf32> to vector<8xf32>
    %13 = vector.shape_cast %12 : vector<8xf32> to vector<8x1xf32>
    %14 = math.log %13 : vector<8x1xf32>
    %15 = vector.broadcast %14 : vector<8x1xf32> to vector<8x50xf32>
    %16 = arith.subf %10, %15 : vector<8x50xf32>
    %17 = tpu.reciprocal %13 : vector<8x1xf32> -> vector<8x1xf32>
    %18 = vector.broadcast %17 : vector<8x1xf32> to vector<8x50xf32>
    %19 = arith.mulf %11, %18 : vector<8x50xf32>
    %cst_4 = arith.constant 1.000000e-07 : f32
    %20 = vector.broadcast %cst_4 : f32 to vector<8x50xf32>
    %21 = arith.maximumf %19, %20 : vector<8x50xf32>
    %22 = arith.mulf %6, %16 : vector<8x50xf32>
    %cst_5 = arith.constant 0.000000e+00 : f32
    %23 = vector.broadcast %cst_5 : f32 to vector<8x50xf32>
    %24 = arith.subf %23, %22 : vector<8x50xf32>
    %cst_6 = arith.constant 1.000000e-01 : f32
    %25 = vector.broadcast %cst_6 : f32 to vector<8x50xf32>
    %26 = arith.mulf %25, %24 : vector<8x50xf32>
    %27 = arith.mulf %6, %21 : vector<8x50xf32>
    %28 = arith.subf %21, %27 : vector<8x50xf32>
    %cst_7 = arith.constant 9.21034049 : f32
    %29 = vector.broadcast %cst_7 : f32 to vector<8x50xf32>
    %30 = arith.mulf %29, %28 : vector<8x50xf32>
    %31 = arith.addf %26, %30 : vector<8x50xf32>
    %32 = vector.shape_cast %31 : vector<8x50xf32> to vector<1x8x50xf32>
    %cst_8 = arith.constant dense<0.000000e+00> : vector<1xf32>
    %33 = vector.multi_reduction <add>, %32, %cst_8 [1, 2] : vector<1x8x50xf32> to vector<1xf32>
    %34 = vector.shape_cast %33 : vector<1xf32> to vector<1x1x1xf32>
    %35 = vector.extract %34[0, 0, 0] : f32 from vector<1x1x1xf32>
    %c0_9 = arith.constant 0 : index
    %c0_10 = arith.constant 0 : index
    %36 = memref.load %arg3[%c0_9, %c0_10] : memref<1x1xf32, #tpu.memory_space<smem>>
    memref.store %35, %arg3[%c0_9, %c0_10] : memref<1x1xf32, #tpu.memory_space<smem>>
    return
  }
  func.func @transform_0(%arg0: i32) -> (i32, i32) {
    %c0_i32 = arith.constant 0 : i32
    %c0_i32_0 = arith.constant 0 : i32
    return %arg0, %c0_i32 : i32, i32
  }
  func.func @transform_1(%arg0: i32) -> (i32, i32) {
    %c0_i32 = arith.constant 0 : i32
    %c0_i32_0 = arith.constant 0 : i32
    return %arg0, %c0_i32 : i32, i32
  }
  func.func @transform_2(%arg0: i32) -> (i32, i32) {
    %c0_i32 = arith.constant 0 : i32
    %c0_i32_0 = arith.constant 0 : i32
    return %arg0, %c0_i32 : i32, i32
  }
}

</mosaic_0001>

<llo_original>
// kernel: sce_loss.1
$region0: #{sce_loss.1}
  #allocation0 [shape = 'u32[]', space=smem, size = 0x4, offset = 0x4, fixed_abs, tag = 'smem constant byte address 0x4 - core index']
  #allocation1 [shape = 'u32[144,128]{1,0:T(1,128)}', space=vmem, size = 0x12000, scoped, tag = 'internal scratch']
  %s0 = inlined_call_operand.vmem [shape: f32[8,50], index: 0, kind: input, shape index: {}]
  %s1 = inlined_call_operand.vmem [shape: s32[8,1], index: 1, kind: input, shape index: {}]
  %s2 = inlined_call_operand.hbm [shape: f32[1,1], index: 2, kind: output, shape index: {}]
  %s3 = sld [smem:[#allocation0]]
  $region18: #{sce_loss.1} parent=0
    _
  %s5 = ssub.s32 1, %s3
  %s6 = scalar_select 0, %s5, %s3
  $region1: #{sce_loss.1} parent=0
    #allocation2 [shape = 'u8[512]{0}', space=smem, size = 0x200, scoped, tag = 'output window, operand 0, single buffered']
    #allocation3 [shape = 's32[1]{0}', space=sflag, size = 0x4, scoped, tag = 'scoped memory for sce_loss.1']
    %7 = vsyncpa [#allocation3], 0
    // Predicated region
    $region2: #{sce_loss.1} parent=1 // pred_check
      _
    $region3: #{sce_loss.1} parent=1 // pred_check_branch
      %9 = sbr.rel (0) target = $region5
    $region4: #{sce_loss.1} parent=1 // pred_region
      _
    $region5: #{sce_loss.1} parent=1 // pred_fallthru
      _
    // Predicated region
    $region6: #{sce_loss.1} parent=1 // pred_check
      _
    $region7: #{sce_loss.1} parent=1 // pred_check_branch
      %11 = sbr.rel (0) target = $region9
    $region8: #{sce_loss.1} parent=1 // pred_region
      _
    $region9: #{sce_loss.1} parent=1 // pred_fallthru
      _
    %v12 = vld [vmem:[%s0] sm:$0xff]
    %v13 = vld [vmem:[%s1] sm:$0xff]
    %v14 = vlaneseq
    %v15 = vand.u32 %v14, 127
    %16 = vset.pattern.permute.xlu0 0
    %17 = vperm.xlu0 %16, %v13
    %v18 = vpop.permute.xlu0 %17
    %vm19 = vcmp.eq.s32.totalorder %v15, %v18
    %v20 = vsel %vm19, 1, 0
    %v21 = vcvt.s32.f32 %v20
    %vm22 = vcmask 408576
    %v23 = vsel %vm22, %v12, -inf
    %24 = vmax.xlane.f32.xlu0 %v23
    %v25 = vpop.xlane.xlu0 %24
    %v26 = vsub.f32 %v12, %v25
    %v27 = vmul.f32 %v26, 1.442695
    %v28 = vpow.pop %v27
    %v29 = vsel %vm22, %v28, 0.0
    %30 = vadd.xlane.f32.xlu0 %v29
    %v31 = vpop.xlane.xlu0 %30
    %v32 = vlog2.pop %v31
    %v33 = vmul.f32 %v32, 0.6931472
    %v34 = vsub.f32 %v26, %v33
    %v35 = vrcp.pop %v31
    %v36 = vmul.f32 %v28, %v35
    %v37 = vmax.f32 %v36, 1e-07
    %v38 = vmul.f32 %v21, %v34
    %v39 = vsub.f32 0.0, %v38
    %v40 = vmul.f32 %v39, 0.1
    %v41 = vmul.f32 %v21, %v37
    %v42 = vsub.f32 %v37, %v41
    %v43 = vmul.f32 %v42, 9.2103405
    %v44 = vadd.f32 %v40, %v43
    %v45 = vsel %vm22, %v44, 0.0
    %46 = vadd.xlane.f32.xlu0 %v45
    %v47 = vpop.xlane.xlu0 %46
    %v48 = vrot.slane %v47, 4
    %v49 = vadd.f32 %v47, %v48
    %v50 = vrot.slane %v49, 2
    %v51 = vadd.f32 %v49, %v50
    %v52 = vrot.slane %v51, 1
    %v53 = vadd.f32 %v51, %v52
    %s54 = vtos %v53
    %s55 = scalar_lea.smem [#allocation2], 0
    %56 = sst [smem:[%s55]] %s54
    // Predicated region
    $region10: #{sce_loss.1} parent=1 // pred_check
      _
    $region11: #{sce_loss.1} parent=1 // pred_check_branch
      %58 = sbr.rel (0) target = $region13
    $region12: #{sce_loss.1} parent=1 // pred_region
      %s60 = ssub.s32 16, 16
      %61 = vsyncadd [#allocation3], %s60
      %64 = dma.smem_to_hbm [#allocation2], 16, %s2, [#allocation3]
    $region13: #{sce_loss.1} parent=1 // pred_fallthru
      _
    // Predicated region
    $region14: #{sce_loss.1} parent=1 // pred_check
      _
    $region15: #{sce_loss.1} parent=1 // pred_check_branch
      %66 = sbr.rel (0) target = $region17
    $region16: #{sce_loss.1} parent=1 // pred_region
      %67 = dma.done [#allocation3], 16
    $region17: #{sce_loss.1} parent=1 // pred_fallthru
      _
    %68 = sfence
    %69 = vsyncpa [#allocation3], 1

</llo_original>
